<compile_context>
chip_gen: v7x
topology: tpu7x:2x2x1
jax: 0.10.0
libtpu: 0.0.40
codegen_flags: <defaults>
</compile_context>

<pallas_src>
import jax
import jax.numpy as jnp
import numpy as np
from jax import lax
from jax.experimental import pallas as pl
from jax.experimental.pallas import tpu as pltpu


# ----------------------------- Pallas kernel ------------------------------- #
def gru_kernel(x_ref, len_ref, w_ih_ref, w_hh_ref, bias_ref, w_lin_ref,
               b_lin_ref, out_ref, h_scr, gx_scr):
    """One (batch-block, time-chunk) grid step of the GRU recurrence."""
    t_idx = pl.program_id(1)
    nt = pl.num_programs(1)
    Bb, H = h_scr.shape
    TB, _ = x_ref.shape          # (Tc*Bb, D) time-major row block
    Tc = TB // Bb

    # Fresh hidden state at the first time chunk of every batch block.
    @pl.when(t_idx == 0)
    def _():
        h_scr[...] = jnp.zeros_like(h_scr)

    # ---- Hoisted input projection (off the serial critical path) ----------
    # gx = x @ W_ih for the whole chunk as ONE well-shaped (Tc*Bb, D)@(D, 3H)
    # MXU matmul (bf16 in, f32 accumulate) instead of Tc tiny per-step dots.
    gx_scr[...] = jnp.dot(x_ref[...], w_ih_ref[...],
                          preferred_element_type=jnp.float32)   # (Tc*Bb, 3H)

    # Hoist resident parameters out of the time loop (one load each).
    w_hh = w_hh_ref[...]                    # (H, 3H) bf16, gate order r|z|n
    bias = bias_ref[...]                    # (1, 4H) f32 = [b_rz | b_in | b_hn]
    b_rz = bias[:, :2 * H]                  # b_ih + b_hh folded for r, z
    b_in = bias[:, 2 * H:3 * H]
    b_hn = bias[:, 3 * H:]                  # kept separate for r * (h_n + b_hn)
    lens = len_ref[...]                     # (Bb, 1) int32
    t0 = t_idx * Tc                         # global time offset of this chunk

    def step(t, h):
        row = pl.multiple_of(t * Bb, Bb)
        gx = gx_scr[pl.ds(row, Bb), :]                                # (Bb, 3H)
        gh = jnp.dot(h.astype(w_hh.dtype), w_hh,
                     preferred_element_type=jnp.float32)              # (Bb, 3H)
        rz = jax.nn.sigmoid(gx[:, :2 * H] + gh[:, :2 * H] + b_rz)     # (Bb, 2H)
        r = rz[:, :H]
        z = rz[:, H:]
        n = jnp.tanh(gx[:, 2 * H:] + b_in + r * (gh[:, 2 * H:] + b_hn))
        h_new = (1.0 - z) * n + z * h
        # pack_padded_sequence semantics: freeze hidden once t >= lengths[b].
        return jnp.where(t0 + t < lens, h_new, h)

    h = lax.fori_loop(0, Tc, step, h_scr[...], unroll=True)
    h_scr[...] = h

    # Fused final Linear, written once per batch block (last time chunk).
    @pl.when(t_idx == nt - 1)
    def _():
        out_ref[...] = (jnp.dot(h, w_lin_ref[...],
                                preferred_element_type=jnp.float32)
                        + b_lin_ref[...])


# ------------------------------- wrapper ------------------------------------ #
def _pick_time_chunk(T, cap=32):
    for d in range(min(T, cap), 0, -1):
        if T % d == 0:
            return d
    return T


def _pick_batch_block(B):
    # Split the batch in half for v7x's two TensorCores when the halves stay
    # (8, 128)-tileable; otherwise keep the whole batch in one block.
    if B % 2 == 0 and (B // 2) % 8 == 0:
        return B // 2
    return B


def gru_forward(x, lengths, params, *, time_chunk=None,
                compute_dtype=jnp.bfloat16):
    B, T, D = x.shape
    H = params["w_hh"].shape[-1]
    C = params["w_lin"].shape[-1]

    Tc = _pick_time_chunk(T) if time_chunk is None else time_chunk
    Bb = _pick_batch_block(B)
    assert T % Tc == 0 and B % Bb == 0
    nb, nt = B // Bb, T // Tc

    # Present x to the kernel as (nb, T*Bb, D): for batch block b, rows
    # [t*Tc*Bb : (t+1)*Tc*Bb] are chunk t in time-major order.  This keeps the
    # in-kernel chunk projection and per-step gx reads 2D (no reshapes).
    # Tiny layout copy at these shapes; at production size it is absorbed by
    # precomputing gx in the wrapper instead.
    x_blk = (jnp.transpose(x, (1, 0, 2))             # (T, B, D)
             .reshape(T, nb, Bb, D)
             .transpose(1, 0, 2, 3)                  # (nb, T, Bb, D)
             .reshape(nb, T * Bb, D)
             .astype(compute_dtype))
    len2d = lengths.astype(jnp.int32).reshape(B, 1)

    # Stack gate weights r|z|n along the output axis: 6 dots/step -> 2.
    w_ih_s = jnp.concatenate([params["w_ih"][g] for g in range(3)],
                             axis=-1).astype(compute_dtype)      # (D, 3H)
    w_hh_s = jnp.concatenate([params["w_hh"][g] for g in range(3)],
                             axis=-1).astype(compute_dtype)      # (H, 3H)

    # Single resident (1, 4H) bias array: [b_rz | b_in | b_hn].  r/z biases
    # folded (b_ih + b_hh); b_hn kept separate for r*(h_n + b_hn).  Broadcast
    # over the batch happens in-kernel on the VPU (free), not in the wrapper.
    bias = jnp.concatenate(
        [(params["b_ih"][0] + params["b_hh"][0]).reshape(1, H),
         (params["b_ih"][1] + params["b_hh"][1]).reshape(1, H),
         params["b_ih"][2].reshape(1, H),
         params["b_hh"][2].reshape(1, H)], axis=-1).astype(jnp.float32)

    w_lin = params["w_lin"].astype(jnp.float32)
    b_lin = params["b_lin"].reshape(1, C).astype(jnp.float32)

    def resident(shape):
        return pl.BlockSpec(shape, lambda b, t, _n=len(shape): (0,) * _n)

    return pl.pallas_call(
        gru_kernel,
        out_shape=jax.ShapeDtypeStruct((B, C), jnp.float32),
        grid_spec=pltpu.PrefetchScalarGridSpec(
            num_scalar_prefetch=0,
            grid=(nb, nt),                       # batch-parallel, time-serial
            in_specs=[
                # x chunk: (Tc*Bb, D) row block, pipelined along time.
                pl.BlockSpec((None, Tc * Bb, D), lambda b, t: (b, t, 0)),
                pl.BlockSpec((Bb, 1), lambda b, t: (b, 0)),      # lengths
                resident((D, 3 * H)),                            # W_ih (bf16)
                resident((H, 3 * H)),                            # W_hh (bf16)
                resident((1, 4 * H)),                            # biases
                resident((H, C)),                                # W_lin
                resident((1, C)),                                # b_lin
            ],
            out_specs=pl.BlockSpec((Bb, C), lambda b, t: (b, 0)),
            scratch_shapes=[
                pltpu.VMEM((Bb, H), jnp.float32),           # hidden-state carry
                pltpu.VMEM((Tc * Bb, 3 * H), jnp.float32),  # hoisted gx chunk
            ]),
        compiler_params=pltpu.CompilerParams(
            dimension_semantics=("parallel", "arbitrary"),
            # Raise v5e's 16 MiB scoped default; stays under v7x's 64 MiB VMEM.
            vmem_limit_bytes=32 * 1024 * 1024),
    )(x_blk, len2d, w_ih_s, w_hh_s, bias, w_lin, b_lin)


# ----------------------- pure-JAX reference (for check) --------------------- #
def gru_ref(x, lengths, p):
    B, T, D = x.shape
    H = p["w_hh"].shape[-1]
    h = jnp.zeros((B, H), jnp.float32)
    for t in range(T):
        xt = x[:, t, :]
        i_r = xt @ p["w_ih"][0] + p["b_ih"][0]
        i_z = xt @ p["w_ih"][1] + p["b_ih"][1]
        i_n = xt @ p["w_ih"][2] + p["b_ih"][2]
        h_r = h @ p["w_hh"][0] + p["b_hh"][0]
        h_z = h @ p["w_hh"][1] + p["b_hh"][1]
        h_n = h @ p["w_hh"][2] + p["b_hh"][2]
        r = jax.nn.sigmoid(i_r + h_r)
        z = jax.nn.sigmoid(i_z + h_z)
        n = jnp.tanh(i_n + r * h_n)
        h_new = (1.0 - z) * n + z * h
        mask = (t < lengths).reshape(B, 1)
        h = jnp.where(mask, h_new, h)
    return h @ p["w_lin"] + p["b_lin"]


# --------------------------------- main -------------------------------------- #
if __name__ == "__main__":
    B, T, D_in, H, C = 4, 8, 8, 32, 6

    key = jax.random.PRNGKey(0)
    ks = jax.random.split(key, 8)
    bound = 1.0 / np.sqrt(H)   # PyTorch default U(-1/sqrt(H), 1/sqrt(H)) init
    u = lambda k, shape: jax.random.uniform(k, shape, jnp.float32, -bound, bound)

    params = {
        "w_ih":  u(ks[0], (3, D_in, H)),   # gates stacked: [r, z, n]
        "w_hh":  u(ks[1], (3, H, H)),
        "b_ih":  u(ks[2], (3, 1, H)),
        "b_hh":  u(ks[3], (3, 1, H)),
        "w_lin": u(ks[4], (H, C)),
        "b_lin": u(ks[5], (1, C)),
    }

    x = jax.random.normal(ks[6], (B, T, D_in), jnp.float32)
    lengths = jnp.array([8, 5, 3, 6], dtype=jnp.int32)

    # time_chunk=4 -> grid nt=2 so the time-chunk pipeline path is exercised.
    out = gru_forward(x, lengths, params, time_chunk=4)
    out = jax.block_until_ready(out)

    ref = gru_ref(x, lengths, params)
    # bf16 MXU inputs (x, gate weights) vs pure-f32 reference -> loosened tol.
    np.testing.assert_allclose(np.asarray(out), np.asarray(ref),
                               rtol=2e-2, atol=2e-2)

    print("KERNEL_OK")
</pallas_src>

<mosaic_0001>
module attributes {stable_mosaic.version = 11 : i64} {
  func.func @gru_kernel(%arg0: i32, %arg1: i32, %arg2: memref<1x16x8xbf16, #tpu.memory_space<vmem>>, %arg3: memref<4x1xi32, #tpu.memory_space<vmem>>, %arg4: memref<8x96xbf16, #tpu.memory_space<vmem>>, %arg5: memref<32x96xbf16, #tpu.memory_space<vmem>>, %arg6: memref<1x128xf32, #tpu.memory_space<vmem>>, %arg7: memref<32x6xf32, #tpu.memory_space<vmem>>, %arg8: memref<1x6xf32, #tpu.memory_space<vmem>>, %arg9: memref<4x6xf32, #tpu.memory_space<vmem>>, %arg10: memref<4x32xf32, #tpu.memory_space<vmem>>, %arg11: memref<16x96xf32, #tpu.memory_space<vmem>>) attributes {dimension_semantics = [#tpu.dimension_semantics<parallel>, #tpu.dimension_semantics<arbitrary>], iteration_bounds = array<i64: 1, 2>, scalar_prefetch = 0 : i64, scratch_operands = 2 : i64, tpu.core_type = #tpu.core_type<tc>, window_params = [{transform_indices = @transform_0, window_bounds = array<i64: 1, 16, 8>}, {transform_indices = @transform_1, window_bounds = array<i64: 4, 1>}, {pipeline_mode = #tpu.pipeline_mode<synchronous>, transform_indices = @transform_2, window_bounds = array<i64: 8, 96>}, {pipeline_mode = #tpu.pipeline_mode<synchronous>, transform_indices = @transform_3, window_bounds = array<i64: 32, 96>}, {pipeline_mode = #tpu.pipeline_mode<synchronous>, transform_indices = @transform_4, window_bounds = array<i64: 1, 128>}, {pipeline_mode = #tpu.pipeline_mode<synchronous>, transform_indices = @transform_5, window_bounds = array<i64: 32, 6>}, {pipeline_mode = #tpu.pipeline_mode<synchronous>, transform_indices = @transform_6, window_bounds = array<i64: 1, 6>}, {transform_indices = @transform_7, window_bounds = array<i64: 4, 6>}]} {
    %c0_i32 = arith.constant 0 : i32
    %0 = arith.cmpi eq, %arg1, %c0_i32 : i32
    %1 = arith.extui %0 : i1 to i32
    %c0_i32_0 = arith.constant 0 : i32
    %2 = arith.cmpi ne, %1, %c0_i32_0 : i32
    scf.if %2 {
      %cst_41 = arith.constant 0.000000e+00 : f32
      %172 = vector.broadcast %cst_41 : f32 to vector<4x32xf32>
      %c0_42 = arith.constant 0 : index
      %c0_43 = arith.constant 0 : index
      %173 = vector.load %arg10[%c0_42, %c0_43] : memref<4x32xf32, #tpu.memory_space<vmem>>, vector<4x32xf32>
      tpu.vector_store %arg10[%c0_42, %c0_43], %172 {strides = array<i32>} : memref<4x32xf32, #tpu.memory_space<vmem>>, vector<4x32xf32>,
    } else {
    }
    %c0 = arith.constant 0 : index
    %c0_1 = arith.constant 0 : index
    %c0_2 = arith.constant 0 : index
    %3 = vector.load %arg2[%c0, %c0_1, %c0_2] : memref<1x16x8xbf16, #tpu.memory_space<vmem>>, vector<1x16x8xbf16>
    %4 = vector.shape_cast %3 : vector<1x16x8xbf16> to vector<16x8xbf16>
    %c0_3 = arith.constant 0 : index
    %c0_4 = arith.constant 0 : index
    %5 = vector.load %arg4[%c0_3, %c0_4] : memref<8x96xbf16, #tpu.memory_space<vmem>>, vector<8x96xbf16>
    %cst = arith.constant dense<0.000000e+00> : vector<16x96xf32>
    %6 = tpu.matmul %4, %5, %cst {dimension_numbers = #tpu.dot_dimension_numbers<[1], [0], [0], [1], [0, 0, 1, 1], [], []>} : vector<16x8xbf16>, vector<8x96xbf16>, vector<16x96xf32> -> vector<16x96xf32>
    %c0_5 = arith.constant 0 : index
    %c0_6 = arith.constant 0 : index
    %7 = vector.load %arg11[%c0_5, %c0_6] : memref<16x96xf32, #tpu.memory_space<vmem>>, vector<16x96xf32>
    tpu.vector_store %arg11[%c0_5, %c0_6], %6 {strides = array<i32>} : memref<16x96xf32, #tpu.memory_space<vmem>>, vector<16x96xf32>,
    %c0_7 = arith.constant 0 : index
    %c0_8 = arith.constant 0 : index
    %8 = vector.load %arg5[%c0_7, %c0_8] : memref<32x96xbf16, #tpu.memory_space<vmem>>, vector<32x96xbf16>
    %c0_9 = arith.constant 0 : index
    %c0_10 = arith.constant 0 : index
    %9 = vector.load %arg6[%c0_9, %c0_10] : memref<1x128xf32, #tpu.memory_space<vmem>>, vector<1x128xf32>
    %10 = vector.extract_strided_slice %9 {offsets = [0, 0], sizes = [1, 64], strides = [1, 1]} : vector<1x128xf32> to vector<1x64xf32>
    %11 = vector.extract_strided_slice %9 {offsets = [0, 64], sizes = [1, 32], strides = [1, 1]} : vector<1x128xf32> to vector<1x32xf32>
    %12 = vector.extract_strided_slice %9 {offsets = [0, 96], sizes = [1, 32], strides = [1, 1]} : vector<1x128xf32> to vector<1x32xf32>
    %c0_11 = arith.constant 0 : index
    %c0_12 = arith.constant 0 : index
    %13 = vector.load %arg3[%c0_11, %c0_12] : memref<4x1xi32, #tpu.memory_space<vmem>>, vector<4x1xi32>
    %c4_i32 = arith.constant 4 : i32
    %14 = arith.muli %arg1, %c4_i32 : i32
    %c0_13 = arith.constant 0 : index
    %c0_14 = arith.constant 0 : index
    %15 = vector.load %arg10[%c0_13, %c0_14] : memref<4x32xf32, #tpu.memory_space<vmem>>, vector<4x32xf32>
    %c0_i32_15 = arith.constant 0 : i32
    %c4_i32_16 = arith.constant 4 : i32
    %16 = arith.muli %c0_i32_15, %c4_i32_16 : i32
    %17 = tpu.assume_multiple %16, 4 : i32
    %18 = arith.index_cast %17 : i32 to index
    %c0_17 = arith.constant 0 : index
    %19 = vector.load %arg11[%18, %c0_17] : memref<16x96xf32, #tpu.memory_space<vmem>>, vector<4x96xf32>
    %20 = arith.truncf %15 : vector<4x32xf32> to vector<4x32xbf16>
    %cst_18 = arith.constant dense<0.000000e+00> : vector<4x96xf32>
    %21 = tpu.matmul %20, %8, %cst_18 {dimension_numbers = #tpu.dot_dimension_numbers<[1], [0], [0], [1], [0, 0, 1, 1], [], []>} : vector<4x32xbf16>, vector<32x96xbf16>, vector<4x96xf32> -> vector<4x96xf32>
    %22 = vector.extract_strided_slice %19 {offsets = [0, 0], sizes = [4, 64], strides = [1, 1]} : vector<4x96xf32> to vector<4x64xf32>
    %23 = vector.extract_strided_slice %21 {offsets = [0, 0], sizes = [4, 64], strides = [1, 1]} : vector<4x96xf32> to vector<4x64xf32>
    %24 = arith.addf %22, %23 : vector<4x64xf32>
    %25 = vector.broadcast %10 : vector<1x64xf32> to vector<4x64xf32>
    %26 = arith.addf %24, %25 : vector<4x64xf32>
    %27 = arith.negf %26 : vector<4x64xf32>
    %28 = math.exp %27 : vector<4x64xf32>
    %cst_19 = arith.constant 1.000000e+00 : f32
    %29 = vector.broadcast %cst_19 : f32 to vector<4x64xf32>
    %30 = arith.addf %29, %28 : vector<4x64xf32>
    %31 = arith.divf %29, %30 : vector<4x64xf32>
    %32 = vector.extract_strided_slice %31 {offsets = [0, 0], sizes = [4, 32], strides = [1, 1]} : vector<4x64xf32> to vector<4x32xf32>
    %33 = vector.extract_strided_slice %31 {offsets = [0, 32], sizes = [4, 32], strides = [1, 1]} : vector<4x64xf32> to vector<4x32xf32>
    %34 = vector.extract_strided_slice %19 {offsets = [0, 64], sizes = [4, 32], strides = [1, 1]} : vector<4x96xf32> to vector<4x32xf32>
    %35 = vector.broadcast %11 : vector<1x32xf32> to vector<4x32xf32>
    %36 = arith.addf %34, %35 : vector<4x32xf32>
    %37 = vector.extract_strided_slice %21 {offsets = [0, 64], sizes = [4, 32], strides = [1, 1]} : vector<4x96xf32> to vector<4x32xf32>
    %38 = vector.broadcast %12 : vector<1x32xf32> to vector<4x32xf32>
    %39 = arith.addf %37, %38 : vector<4x32xf32>
    %40 = arith.mulf %32, %39 : vector<4x32xf32>
    %41 = arith.addf %36, %40 : vector<4x32xf32>
    %42 = math.tanh %41 : vector<4x32xf32>
    %cst_20 = arith.constant 1.000000e+00 : f32
    %43 = vector.broadcast %cst_20 : f32 to vector<4x32xf32>
    %44 = arith.subf %43, %33 : vector<4x32xf32>
    %45 = arith.mulf %44, %42 : vector<4x32xf32>
    %46 = arith.mulf %33, %15 : vector<4x32xf32>
    %47 = arith.addf %45, %46 : vector<4x32xf32>
    %48 = arith.addi %14, %c0_i32_15 : i32
    %49 = vector.broadcast %48 : i32 to vector<4x1xi32>
    %50 = arith.cmpi slt, %49, %13 : vector<4x1xi32>
    %51 = vector.shape_cast %50 : vector<4x1xi1> to vector<4x1xi1>
    %52 = vector.broadcast %51 : vector<4x1xi1> to vector<4x32xi1>
    %53 = arith.select %52, %47, %15 : vector<4x32xi1>, vector<4x32xf32>
    %c1_i32 = arith.constant 1 : i32
    %c4_i32_21 = arith.constant 4 : i32
    %54 = arith.muli %c1_i32, %c4_i32_21 : i32
    %55 = tpu.assume_multiple %54, 4 : i32
    %56 = arith.index_cast %55 : i32 to index
    %c0_22 = arith.constant 0 : index
    %57 = vector.load %arg11[%56, %c0_22] : memref<16x96xf32, #tpu.memory_space<vmem>>, vector<4x96xf32>
    %58 = arith.truncf %53 : vector<4x32xf32> to vector<4x32xbf16>
    %cst_23 = arith.constant dense<0.000000e+00> : vector<4x96xf32>
    %59 = tpu.matmul %58, %8, %cst_23 {dimension_numbers = #tpu.dot_dimension_numbers<[1], [0], [0], [1], [0, 0, 1, 1], [], []>} : vector<4x32xbf16>, vector<32x96xbf16>, vector<4x96xf32> -> vector<4x96xf32>
    %60 = vector.extract_strided_slice %57 {offsets = [0, 0], sizes = [4, 64], strides = [1, 1]} : vector<4x96xf32> to vector<4x64xf32>
    %61 = vector.extract_strided_slice %59 {offsets = [0, 0], sizes = [4, 64], strides = [1, 1]} : vector<4x96xf32> to vector<4x64xf32>
    %62 = arith.addf %60, %61 : vector<4x64xf32>
    %63 = vector.broadcast %10 : vector<1x64xf32> to vector<4x64xf32>
    %64 = arith.addf %62, %63 : vector<4x64xf32>
    %65 = arith.negf %64 : vector<4x64xf32>
    %66 = math.exp %65 : vector<4x64xf32>
    %cst_24 = arith.constant 1.000000e+00 : f32
    %67 = vector.broadcast %cst_24 : f32 to vector<4x64xf32>
    %68 = arith.addf %67, %66 : vector<4x64xf32>
    %69 = arith.divf %67, %68 : vector<4x64xf32>
    %70 = vector.extract_strided_slice %69 {offsets = [0, 0], sizes = [4, 32], strides = [1, 1]} : vector<4x64xf32> to vector<4x32xf32>
    %71 = vector.extract_strided_slice %69 {offsets = [0, 32], sizes = [4, 32], strides = [1, 1]} : vector<4x64xf32> to vector<4x32xf32>
    %72 = vector.extract_strided_slice %57 {offsets = [0, 64], sizes = [4, 32], strides = [1, 1]} : vector<4x96xf32> to vector<4x32xf32>
    %73 = vector.broadcast %11 : vector<1x32xf32> to vector<4x32xf32>
    %74 = arith.addf %72, %73 : vector<4x32xf32>
    %75 = vector.extract_strided_slice %59 {offsets = [0, 64], sizes = [4, 32], strides = [1, 1]} : vector<4x96xf32> to vector<4x32xf32>
    %76 = vector.broadcast %12 : vector<1x32xf32> to vector<4x32xf32>
    %77 = arith.addf %75, %76 : vector<4x32xf32>
    %78 = arith.mulf %70, %77 : vector<4x32xf32>
    %79 = arith.addf %74, %78 : vector<4x32xf32>
    %80 = math.tanh %79 : vector<4x32xf32>
    %cst_25 = arith.constant 1.000000e+00 : f32
    %81 = vector.broadcast %cst_25 : f32 to vector<4x32xf32>
    %82 = arith.subf %81, %71 : vector<4x32xf32>
    %83 = arith.mulf %82, %80 : vector<4x32xf32>
    %84 = arith.mulf %71, %53 : vector<4x32xf32>
    %85 = arith.addf %83, %84 : vector<4x32xf32>
    %86 = arith.addi %14, %c1_i32 : i32
    %87 = vector.broadcast %86 : i32 to vector<4x1xi32>
    %88 = arith.cmpi slt, %87, %13 : vector<4x1xi32>
    %89 = vector.shape_cast %88 : vector<4x1xi1> to vector<4x1xi1>
    %90 = vector.broadcast %89 : vector<4x1xi1> to vector<4x32xi1>
    %91 = arith.select %90, %85, %53 : vector<4x32xi1>, vector<4x32xf32>
    %c2_i32 = arith.constant 2 : i32
    %c4_i32_26 = arith.constant 4 : i32
    %92 = arith.muli %c2_i32, %c4_i32_26 : i32
    %93 = tpu.assume_multiple %92, 4 : i32
    %94 = arith.index_cast %93 : i32 to index
    %c0_27 = arith.constant 0 : index
    %95 = vector.load %arg11[%94, %c0_27] : memref<16x96xf32, #tpu.memory_space<vmem>>, vector<4x96xf32>
    %96 = arith.truncf %91 : vector<4x32xf32> to vector<4x32xbf16>
    %cst_28 = arith.constant dense<0.000000e+00> : vector<4x96xf32>
    %97 = tpu.matmul %96, %8, %cst_28 {dimension_numbers = #tpu.dot_dimension_numbers<[1], [0], [0], [1], [0, 0, 1, 1], [], []>} : vector<4x32xbf16>, vector<32x96xbf16>, vector<4x96xf32> -> vector<4x96xf32>
    %98 = vector.extract_strided_slice %95 {offsets = [0, 0], sizes = [4, 64], strides = [1, 1]} : vector<4x96xf32> to vector<4x64xf32>
    %99 = vector.extract_strided_slice %97 {offsets = [0, 0], sizes = [4, 64], strides = [1, 1]} : vector<4x96xf32> to vector<4x64xf32>
    %100 = arith.addf %98, %99 : vector<4x64xf32>
    %101 = vector.broadcast %10 : vector<1x64xf32> to vector<4x64xf32>
    %102 = arith.addf %100, %101 : vector<4x64xf32>
    %103 = arith.negf %102 : vector<4x64xf32>
    %104 = math.exp %103 : vector<4x64xf32>
    %cst_29 = arith.constant 1.000000e+00 : f32
    %105 = vector.broadcast %cst_29 : f32 to vector<4x64xf32>
    %106 = arith.addf %105, %104 : vector<4x64xf32>
    %107 = arith.divf %105, %106 : vector<4x64xf32>
    %108 = vector.extract_strided_slice %107 {offsets = [0, 0], sizes = [4, 32], strides = [1, 1]} : vector<4x64xf32> to vector<4x32xf32>
    %109 = vector.extract_strided_slice %107 {offsets = [0, 32], sizes = [4, 32], strides = [1, 1]} : vector<4x64xf32> to vector<4x32xf32>
    %110 = vector.extract_strided_slice %95 {offsets = [0, 64], sizes = [4, 32], strides = [1, 1]} : vector<4x96xf32> to vector<4x32xf32>
    %111 = vector.broadcast %11 : vector<1x32xf32> to vector<4x32xf32>
    %112 = arith.addf %110, %111 : vector<4x32xf32>
    %113 = vector.extract_strided_slice %97 {offsets = [0, 64], sizes = [4, 32], strides = [1, 1]} : vector<4x96xf32> to vector<4x32xf32>
    %114 = vector.broadcast %12 : vector<1x32xf32> to vector<4x32xf32>
    %115 = arith.addf %113, %114 : vector<4x32xf32>
    %116 = arith.mulf %108, %115 : vector<4x32xf32>
    %117 = arith.addf %112, %116 : vector<4x32xf32>
    %118 = math.tanh %117 : vector<4x32xf32>
    %cst_30 = arith.constant 1.000000e+00 : f32
    %119 = vector.broadcast %cst_30 : f32 to vector<4x32xf32>
    %120 = arith.subf %119, %109 : vector<4x32xf32>
    %121 = arith.mulf %120, %118 : vector<4x32xf32>
    %122 = arith.mulf %109, %91 : vector<4x32xf32>
    %123 = arith.addf %121, %122 : vector<4x32xf32>
    %124 = arith.addi %14, %c2_i32 : i32
    %125 = vector.broadcast %124 : i32 to vector<4x1xi32>
    %126 = arith.cmpi slt, %125, %13 : vector<4x1xi32>
    %127 = vector.shape_cast %126 : vector<4x1xi1> to vector<4x1xi1>
    %128 = vector.broadcast %127 : vector<4x1xi1> to vector<4x32xi1>
    %129 = arith.select %128, %123, %91 : vector<4x32xi1>, vector<4x32xf32>
    %c3_i32 = arith.constant 3 : i32
    %c4_i32_31 = arith.constant 4 : i32
    %130 = arith.muli %c3_i32, %c4_i32_31 : i32
    %131 = tpu.assume_multiple %130, 4 : i32
    %132 = arith.index_cast %131 : i32 to index
    %c0_32 = arith.constant 0 : index
    %133 = vector.load %arg11[%132, %c0_32] : memref<16x96xf32, #tpu.memory_space<vmem>>, vector<4x96xf32>
    %134 = arith.truncf %129 : vector<4x32xf32> to vector<4x32xbf16>
    %cst_33 = arith.constant dense<0.000000e+00> : vector<4x96xf32>
    %135 = tpu.matmul %134, %8, %cst_33 {dimension_numbers = #tpu.dot_dimension_numbers<[1], [0], [0], [1], [0, 0, 1, 1], [], []>} : vector<4x32xbf16>, vector<32x96xbf16>, vector<4x96xf32> -> vector<4x96xf32>
    %136 = vector.extract_strided_slice %133 {offsets = [0, 0], sizes = [4, 64], strides = [1, 1]} : vector<4x96xf32> to vector<4x64xf32>
    %137 = vector.extract_strided_slice %135 {offsets = [0, 0], sizes = [4, 64], strides = [1, 1]} : vector<4x96xf32> to vector<4x64xf32>
    %138 = arith.addf %136, %137 : vector<4x64xf32>
    %139 = vector.broadcast %10 : vector<1x64xf32> to vector<4x64xf32>
    %140 = arith.addf %138, %139 : vector<4x64xf32>
    %141 = arith.negf %140 : vector<4x64xf32>
    %142 = math.exp %141 : vector<4x64xf32>
    %cst_34 = arith.constant 1.000000e+00 : f32
    %143 = vector.broadcast %cst_34 : f32 to vector<4x64xf32>
    %144 = arith.addf %143, %142 : vector<4x64xf32>
    %145 = arith.divf %143, %144 : vector<4x64xf32>
    %146 = vector.extract_strided_slice %145 {offsets = [0, 0], sizes = [4, 32], strides = [1, 1]} : vector<4x64xf32> to vector<4x32xf32>
    %147 = vector.extract_strided_slice %145 {offsets = [0, 32], sizes = [4, 32], strides = [1, 1]} : vector<4x64xf32> to vector<4x32xf32>
    %148 = vector.extract_strided_slice %133 {offsets = [0, 64], sizes = [4, 32], strides = [1, 1]} : vector<4x96xf32> to vector<4x32xf32>
    %149 = vector.broadcast %11 : vector<1x32xf32> to vector<4x32xf32>
    %150 = arith.addf %148, %149 : vector<4x32xf32>
    %151 = vector.extract_strided_slice %135 {offsets = [0, 64], sizes = [4, 32], strides = [1, 1]} : vector<4x96xf32> to vector<4x32xf32>
    %152 = vector.broadcast %12 : vector<1x32xf32> to vector<4x32xf32>
    %153 = arith.addf %151, %152 : vector<4x32xf32>
    %154 = arith.mulf %146, %153 : vector<4x32xf32>
    %155 = arith.addf %150, %154 : vector<4x32xf32>
    %156 = math.tanh %155 : vector<4x32xf32>
    %cst_35 = arith.constant 1.000000e+00 : f32
    %157 = vector.broadcast %cst_35 : f32 to vector<4x32xf32>
    %158 = arith.subf %157, %147 : vector<4x32xf32>
    %159 = arith.mulf %158, %156 : vector<4x32xf32>
    %160 = arith.mulf %147, %129 : vector<4x32xf32>
    %161 = arith.addf %159, %160 : vector<4x32xf32>
    %162 = arith.addi %14, %c3_i32 : i32
    %163 = vector.broadcast %162 : i32 to vector<4x1xi32>
    %164 = arith.cmpi slt, %163, %13 : vector<4x1xi32>
    %165 = vector.shape_cast %164 : vector<4x1xi1> to vector<4x1xi1>
    %166 = vector.broadcast %165 : vector<4x1xi1> to vector<4x32xi1>
    %167 = arith.select %166, %161, %129 : vector<4x32xi1>, vector<4x32xf32>
    %c4_i32_36 = arith.constant 4 : i32
    %c0_37 = arith.constant 0 : index
    %c0_38 = arith.constant 0 : index
    %168 = vector.load %arg10[%c0_37, %c0_38] : memref<4x32xf32, #tpu.memory_space<vmem>>, vector<4x32xf32>
    tpu.vector_store %arg10[%c0_37, %c0_38], %167 {strides = array<i32>} : memref<4x32xf32, #tpu.memory_space<vmem>>, vector<4x32xf32>,
    %c1_i32_39 = arith.constant 1 : i32
    %169 = arith.cmpi eq, %arg1, %c1_i32_39 : i32
    %170 = arith.extui %169 : i1 to i32
    %c0_i32_40 = arith.constant 0 : i32
    %171 = arith.cmpi ne, %170, %c0_i32_40 : i32
    scf.if %171 {
      %c0_41 = arith.constant 0 : index
      %c0_42 = arith.constant 0 : index
      %172 = vector.load %arg7[%c0_41, %c0_42] : memref<32x6xf32, #tpu.memory_space<vmem>>, vector<32x6xf32>
      %cst_43 = arith.constant dense<0.000000e+00> : vector<4x6xf32>
      %173 = tpu.matmul %167, %172, %cst_43 {dimension_numbers = #tpu.dot_dimension_numbers<[1], [0], [0], [1], [0, 0, 1, 1], [], []>} : vector<4x32xf32>, vector<32x6xf32>, vector<4x6xf32> -> vector<4x6xf32>
      %c0_44 = arith.constant 0 : index
      %c0_45 = arith.constant 0 : index
      %174 = vector.load %arg8[%c0_44, %c0_45] : memref<1x6xf32, #tpu.memory_space<vmem>>, vector<1x6xf32>
      %175 = vector.broadcast %174 : vector<1x6xf32> to vector<4x6xf32>
      %176 = arith.addf %173, %175 : vector<4x6xf32>
      %c0_46 = arith.constant 0 : index
      %c0_47 = arith.constant 0 : index
      %177 = vector.load %arg9[%c0_46, %c0_47] : memref<4x6xf32, #tpu.memory_space<vmem>>, vector<4x6xf32>
      tpu.vector_store %arg9[%c0_46, %c0_47], %176 {strides = array<i32>} : memref<4x6xf32, #tpu.memory_space<vmem>>, vector<4x6xf32>,
    } else {
    }
    return
  }
  func.func @transform_0(%arg0: i32, %arg1: i32) -> (i32, i32, i32) {
    %c0_i32 = arith.constant 0 : i32
    %c0_i32_0 = arith.constant 0 : i32
    return %arg0, %arg1, %c0_i32 : i32, i32, i32
  }
  func.func @transform_1(%arg0: i32, %arg1: i32) -> (i32, i32) {
    %c0_i32 = arith.constant 0 : i32
    %c0_i32_0 = arith.constant 0 : i32
    return %arg0, %c0_i32 : i32, i32
  }
  func.func @transform_2(%arg0: i32, %arg1: i32) -> (i32, i32) {
    %c0_i32 = arith.constant 0 : i32
    %c0_i32_0 = arith.constant 0 : i32
    %c0_i32_1 = arith.constant 0 : i32
    return %c0_i32, %c0_i32_0 : i32, i32
  }
  func.func @transform_3(%arg0: i32, %arg1: i32) -> (i32, i32) {
    %c0_i32 = arith.constant 0 : i32
    %c0_i32_0 = arith.constant 0 : i32
    %c0_i32_1 = arith.constant 0 : i32
    return %c0_i32, %c0_i32_0 : i32, i32
  }
  func.func @transform_4(%arg0: i32, %arg1: i32) -> (i32, i32) {
    %c0_i32 = arith.constant 0 : i32
    %c0_i32_0 = arith.constant 0 : i32
    %c0_i32_1 = arith.constant 0 : i32
    return %c0_i32, %c0_i32_0 : i32, i32
  }
  func.func @transform_5(%arg0: i32, %arg1: i32) -> (i32, i32) {
    %c0_i32 = arith.constant 0 : i32
    %c0_i32_0 = arith.constant 0 : i32
    %c0_i32_1 = arith.constant 0 : i32
    return %c0_i32, %c0_i32_0 : i32, i32
  }
  func.func @transform_6(%arg0: i32, %arg1: i32) -> (i32, i32) {
    %c0_i32 = arith.constant 0 : i32
    %c0_i32_0 = arith.constant 0 : i32
    %c0_i32_1 = arith.constant 0 : i32
    return %c0_i32, %c0_i32_0 : i32, i32
  }
  func.func @transform_7(%arg0: i32, %arg1: i32) -> (i32, i32) {
    %c0_i32 = arith.constant 0 : i32
    %c0_i32_0 = arith.constant 0 : i32
    return %arg0, %c0_i32 : i32, i32
  }
}

</mosaic_0001>

<llo_original>
// kernel: tpu_custom_call.1
$region0: #{tpu_custom_call.1}
  #allocation0 [shape = 'u32[]', space=smem, size = 0x4, offset = 0x4, fixed_abs, tag = 'smem constant byte address 0x4 - core index']
  #allocation1 [shape = 'u32[144,128]{1,0:T(1,128)}', space=vmem, size = 0x12000, scoped, tag = 'internal scratch']
  #allocation2 [shape = 'f32[4,32]{1,0:T(4,128)}', space=vmem, size = 0x800, scoped, tag = 'scratch operand']
  #allocation3 [shape = 'f32[16,96]{1,0:T(8,128)}', space=vmem, size = 0x2000, scoped, tag = 'scratch operand']
  %s0 = inlined_call_operand.vmem [shape: bf16[1,32,8], index: 0, kind: input, shape index: {}]
  %s1 = inlined_call_operand.vmem [shape: s32[4,1], index: 1, kind: input, shape index: {}]
  %s2 = inlined_call_operand.vmem [shape: bf16[8,96], index: 2, kind: input, shape index: {}]
  %s3 = inlined_call_operand.vmem [shape: bf16[32,96], index: 3, kind: input, shape index: {}]
  %s4 = inlined_call_operand.vmem [shape: f32[1,128], index: 4, kind: input, shape index: {}]
  %s5 = inlined_call_operand.vmem [shape: f32[32,6], index: 5, kind: input, shape index: {}]
  %s6 = inlined_call_operand.vmem [shape: f32[1,6], index: 6, kind: input, shape index: {}]
  %s7 = inlined_call_operand.hbm [shape: f32[4,6], index: 7, kind: output, shape index: {}]
  %s8 = sld [smem:[#allocation0]]
  $region69: #{tpu_custom_call.1} parent=0
    _
  %s10 = ssub.s32 1, %s8
  %s11 = scalar_select 0, %s10, %s8
  $region1: #{tpu_custom_call.1} parent=0
    #allocation4 [shape = 'u8[2048]{0}', space=vmem, size = 0x800, scoped, tag = 'output window, operand 0, single buffered']
    #allocation5 [shape = 's32[2]{0}', space=sflag, size = 0x8, scoped, tag = 'scoped memory for tpu_custom_call.1']
    %12 = vsyncpa [#allocation5], 0
    loop: start=0, step=1, limit=4
    $region2: #{tpu_custom_call.1} parent=1 // loop_pre_header
      _
    $region3: #{tpu_custom_call.1} parent=1 // loop_header
      %s14 = sphi 0, %s18
      %p15 = scmp.ge.s32.totalorder %s14, 4
      %s21 = sphi 0, %s33
      %s22 = sphi 0, %s29
      %s23 = sphi 0, %s21
      %s24 = sphi 0, %s22
      %s25 = sphi 0, %s23
      %s26 = sphi 0, %s24
      %s38 = sphi 0, %s40
      %s41 = sphi 0, %s38
      %s42 = sphi 0, %s41
      %s58 = sphi 0, %s42
      %s64 = sphi 0, %s66
      %s67 = sphi 0, %s64
      %s68 = sphi 0, %s67
      %s84 = sphi 0, %s68
      %s88 = sphi 0, %s88
      %s90 = sphi 0, %s88
      %s91 = sphi 0, %s90
      %s105 = sphi 0, %s91
      %s109 = sphi 0, %s109
      %s111 = sphi 0, %s109
      %s112 = sphi 0, %s111
      %s126 = sphi 0, %s112
      %s130 = sphi 0, %s130
      %s132 = sphi 0, %s130
      %s133 = sphi 0, %s132
      %s147 = sphi 0, %s133
      %s151 = sphi 0, %s151
      %s153 = sphi 0, %s151
      %s154 = sphi 0, %s153
      %s168 = sphi 0, %s154
      %s172 = sphi 0, %s172
      %s174 = sphi 0, %s172
      %s175 = sphi 0, %s174
      %s189 = sphi 0, %s175
      %s195 = sphi 0, %s197
      %s198 = sphi 0, %s195
      %s199 = sphi 0, %s198
      %s215 = sphi 0, %s199
    $region4: #{tpu_custom_call.1} parent=1 // loop_header_branch
      %17 = sbr.rel (%p15) target = $region8
    $region5: #{tpu_custom_call.1} parent=1 // loop_body
      %s19 = ssub.s32 %s14, 1
      %s20 = ssub.s32 %s14, 2
      %s27 = sadd.s32 1, %s22
      %p28 = scmp.ge.s32.totalorder %s27, 2
      %s29 = scalar_select %p28, 0, %s27
      %s30 = sadd.s32 1, %s21
      %s31 = scalar_select %p28, %s30, %s21
      %p32 = scmp.ge.s32.totalorder %s31, 1
      %s33 = scalar_select %p32, 0, %s31
      %s34 = ssub.s32 %s21, %s33
      %s35 = ssub.s32 %s22, %s29
      %s36 = sor.u32 %s34, %s35
      %p37 = scmp.eq.s32.totalorder %s36, 0
      %s39 = sadd.s32 %s38, 1
      %s40 = scalar_select %p37, %s38, %s39
      %p43 = pneg %p37
      %p44 = scmp.eq.s32.totalorder %s14, 1
      %p45 = por %p43, %p44
      %p46 = scmp.ne.s32.totalorder %s38, %s41
      %p47 = scmp.eq.s32.totalorder %s14, 0
      %p48 = por %p46, %p47
      %p49 = scmp.ne.s32.totalorder %s38, %s41
      %p50 = scmp.eq.s32.totalorder %s19, 1
      %p51 = por %p49, %p50
      %p52 = scmp.ne.s32.totalorder %s41, %s42
      %p53 = scmp.eq.s32.totalorder %s19, 0
      %p54 = por %p52, %p53
      %p55 = scmp.ne.s32.totalorder %s41, %s42
      %p56 = scmp.eq.s32.totalorder %s20, 1
      %p57 = por %p55, %p56
      %p59 = scmp.ne.s32.totalorder %s42, %s58
      %p60 = scmp.eq.s32.totalorder %s20, 0
      %p61 = por %p59, %p60
      %s62 = ssub.s32 %s21, %s33
      %p63 = scmp.eq.s32.totalorder %s62, 0
      %s65 = sadd.s32 %s64, 1
      %s66 = scalar_select %p63, %s64, %s65
      %p69 = pneg %p63
      %p70 = scmp.eq.s32.totalorder %s14, 1
      %p71 = por %p69, %p70
      %p72 = scmp.ne.s32.totalorder %s64, %s67
      %p73 = scmp.eq.s32.totalorder %s14, 0
      %p74 = por %p72, %p73
      %p75 = scmp.ne.s32.totalorder %s64, %s67
      %p76 = scmp.eq.s32.totalorder %s19, 1
      %p77 = por %p75, %p76
      %p78 = scmp.ne.s32.totalorder %s67, %s68
      %p79 = scmp.eq.s32.totalorder %s19, 0
      %p80 = por %p78, %p79
      %p81 = scmp.ne.s32.totalorder %s67, %s68
      %p82 = scmp.eq.s32.totalorder %s20, 1
      %p83 = por %p81, %p82
      %p85 = scmp.ne.s32.totalorder %s68, %s84
      %p86 = scmp.eq.s32.totalorder %s20, 0
      %p87 = por %p85, %p86
      %s89 = sadd.s32 %s88, 1
      %p92 = scmp.eq.s32.totalorder %s14, 1
      %p93 = scmp.ne.s32.totalorder %s88, %s90
      %p94 = scmp.eq.s32.totalorder %s14, 0
      %p95 = por %p93, %p94
      %p96 = scmp.ne.s32.totalorder %s88, %s90
      %p97 = scmp.eq.s32.totalorder %s19, 1
      %p98 = por %p96, %p97
      %p99 = scmp.ne.s32.totalorder %s90, %s91
      %p100 = scmp.eq.s32.totalorder %s19, 0
      %p101 = por %p99, %p100
      %p102 = scmp.ne.s32.totalorder %s90, %s91
      %p103 = scmp.eq.s32.totalorder %s20, 1
      %p104 = por %p102, %p103
      %p106 = scmp.ne.s32.totalorder %s91, %s105
      %p107 = scmp.eq.s32.totalorder %s20, 0
      %p108 = por %p106, %p107
      %s110 = sadd.s32 %s109, 1
      %p113 = scmp.eq.s32.totalorder %s14, 1
      %p114 = scmp.ne.s32.totalorder %s109, %s111
      %p115 = scmp.eq.s32.totalorder %s14, 0
      %p116 = por %p114, %p115
      %p117 = scmp.ne.s32.totalorder %s109, %s111
      %p118 = scmp.eq.s32.totalorder %s19, 1
      %p119 = por %p117, %p118
      %p120 = scmp.ne.s32.totalorder %s111, %s112
      %p121 = scmp.eq.s32.totalorder %s19, 0
      %p122 = por %p120, %p121
      %p123 = scmp.ne.s32.totalorder %s111, %s112
      %p124 = scmp.eq.s32.totalorder %s20, 1
      %p125 = por %p123, %p124
      %p127 = scmp.ne.s32.totalorder %s112, %s126
      %p128 = scmp.eq.s32.totalorder %s20, 0
      %p129 = por %p127, %p128
      %s131 = sadd.s32 %s130, 1
      %p134 = scmp.eq.s32.totalorder %s14, 1
      %p135 = scmp.ne.s32.totalorder %s130, %s132
      %p136 = scmp.eq.s32.totalorder %s14, 0
      %p137 = por %p135, %p136
      %p138 = scmp.ne.s32.totalorder %s130, %s132
      %p139 = scmp.eq.s32.totalorder %s19, 1
      %p140 = por %p138, %p139
      %p141 = scmp.ne.s32.totalorder %s132, %s133
      %p142 = scmp.eq.s32.totalorder %s19, 0
      %p143 = por %p141, %p142
      %p144 = scmp.ne.s32.totalorder %s132, %s133
      %p145 = scmp.eq.s32.totalorder %s20, 1
      %p146 = por %p144, %p145
      %p148 = scmp.ne.s32.totalorder %s133, %s147
      %p149 = scmp.eq.s32.totalorder %s20, 0
      %p150 = por %p148, %p149
      %s152 = sadd.s32 %s151, 1
      %p155 = scmp.eq.s32.totalorder %s14, 1
      %p156 = scmp.ne.s32.totalorder %s151, %s153
      %p157 = scmp.eq.s32.totalorder %s14, 0
      %p158 = por %p156, %p157
      %p159 = scmp.ne.s32.totalorder %s151, %s153
      %p160 = scmp.eq.s32.totalorder %s19, 1
      %p161 = por %p159, %p160
      %p162 = scmp.ne.s32.totalorder %s153, %s154
      %p163 = scmp.eq.s32.totalorder %s19, 0
      %p164 = por %p162, %p163
      %p165 = scmp.ne.s32.totalorder %s153, %s154
      %p166 = scmp.eq.s32.totalorder %s20, 1
      %p167 = por %p165, %p166
      %p169 = scmp.ne.s32.totalorder %s154, %s168
      %p170 = scmp.eq.s32.totalorder %s20, 0
      %p171 = por %p169, %p170
      %s173 = sadd.s32 %s172, 1
      %p176 = scmp.eq.s32.totalorder %s14, 1
      %p177 = scmp.ne.s32.totalorder %s172, %s174
      %p178 = scmp.eq.s32.totalorder %s14, 0
      %p179 = por %p177, %p178
      %p180 = scmp.ne.s32.totalorder %s172, %s174
      %p181 = scmp.eq.s32.totalorder %s19, 1
      %p182 = por %p180, %p181
      %p183 = scmp.ne.s32.totalorder %s174, %s175
      %p184 = scmp.eq.s32.totalorder %s19, 0
      %p185 = por %p183, %p184
      %p186 = scmp.ne.s32.totalorder %s174, %s175
      %p187 = scmp.eq.s32.totalorder %s20, 1
      %p188 = por %p186, %p187
      %p190 = scmp.ne.s32.totalorder %s175, %s189
      %p191 = scmp.eq.s32.totalorder %s20, 0
      %p192 = por %p190, %p191
      %s193 = ssub.s32 %s21, %s33
      %p194 = scmp.eq.s32.totalorder %s193, 0
      %s196 = sadd.s32 %s195, 1
      %s197 = scalar_select %p194, %s195, %s196
      %p200 = pneg %p194
      %p201 = scmp.eq.s32.totalorder %s14, 1
      %p202 = por %p200, %p201
      %p203 = scmp.ne.s32.totalorder %s195, %s198
      %p204 = scmp.eq.s32.totalorder %s14, 0
      %p205 = por %p203, %p204
      %p206 = scmp.ne.s32.totalorder %s195, %s198
      %p207 = scmp.eq.s32.totalorder %s19, 1
      %p208 = por %p206, %p207
      %p209 = scmp.ne.s32.totalorder %s198, %s199
      %p210 = scmp.eq.s32.totalorder %s19, 0
      %p211 = por %p209, %p210
      %p212 = scmp.ne.s32.totalorder %s198, %s199
      %p213 = scmp.eq.s32.totalorder %s20, 1
      %p214 = por %p212, %p213
      %p216 = scmp.ne.s32.totalorder %s199, %s215
      %p217 = scmp.eq.s32.totalorder %s20, 0
      %p218 = por %p216, %p217
      %p219 = scmp.le.s32.totalorder 1, %s14
      %p220 = scmp.lt.s32.totalorder %s14, 3
      %p221 = pnand %p219, %p220
      %p222 = pneg %p221
      // Predicated region
      $region9: #{tpu_custom_call.1} parent=5 // pred_check
        _
      $region10: #{tpu_custom_call.1} parent=5 // pred_check_branch
        %224 = sbr.rel (%p221) target = $region12
      $region11: #{tpu_custom_call.1} parent=5 // pred_region
        %s225 = ssub.s32 %s14, 1
        // Predicated region
        $region13: #{tpu_custom_call.1} parent=11 // pred_check
          %p226 = pneg %p80
        $region14: #{tpu_custom_call.1} parent=11 // pred_check_branch
          %228 = sbr.rel (%p226) target = $region16
        $region15: #{tpu_custom_call.1} parent=11 // pred_region
          %p229 = scmp.lt.s32.totalorder %s23, 0
          %s230 = scalar_select %p229, %s23, 0
          %s231 = smul.addr %s230, 4
          %s232 = scalar_lea.vmem %s1, %s231
        $region16: #{tpu_custom_call.1} parent=11 // pred_fallthru
          _
        // Predicated region
        $region17: #{tpu_custom_call.1} parent=11 // pred_check
          %p233 = pneg %p101
        $region18: #{tpu_custom_call.1} parent=11 // pred_check_branch
          %235 = sbr.rel (%p233) target = $region20
        $region19: #{tpu_custom_call.1} parent=11 // pred_region
          _
        $region20: #{tpu_custom_call.1} parent=11 // pred_fallthru
          _
        // Predicated region
        $region21: #{tpu_custom_call.1} parent=11 // pred_check
          %p236 = pneg %p122
        $region22: #{tpu_custom_call.1} parent=11 // pred_check_branch
          %238 = sbr.rel (%p236) target = $region24
        $region23: #{tpu_custom_call.1} parent=11 // pred_region
          _
        $region24: #{tpu_custom_call.1} parent=11 // pred_fallthru
          _
        // Predicated region
        $region25: #{tpu_custom_call.1} parent=11 // pred_check
          %p239 = pneg %p143
        $region26: #{tpu_custom_call.1} parent=11 // pred_check_branch
          %241 = sbr.rel (%p239) target = $region28
        $region27: #{tpu_custom_call.1} parent=11 // pred_region
          _
        $region28: #{tpu_custom_call.1} parent=11 // pred_fallthru
          _
        // Predicated region
        $region29: #{tpu_custom_call.1} parent=11 // pred_check
          %p242 = pneg %p164
        $region30: #{tpu_custom_call.1} parent=11 // pred_check_branch
          %244 = sbr.rel (%p242) target = $region32
        $region31: #{tpu_custom_call.1} parent=11 // pred_region
          _
        $region32: #{tpu_custom_call.1} parent=11 // pred_fallthru
          _
        // Predicated region
        $region33: #{tpu_custom_call.1} parent=11 // pred_check
          %p245 = pneg %p185
        $region34: #{tpu_custom_call.1} parent=11 // pred_check_branch
          %247 = sbr.rel (%p245) target = $region36
        $region35: #{tpu_custom_call.1} parent=11 // pred_region
          _
        $region36: #{tpu_custom_call.1} parent=11 // pred_fallthru
          _
      $region12: #{tpu_custom_call.1} parent=5 // pred_fallthru
        _
      %p248 = scmp.lt.s32.totalorder %s14, 2
      // Predicated region
      $region37: #{tpu_custom_call.1} parent=5 // pred_check
        %p249 = pneg %p248
      $region38: #{tpu_custom_call.1} parent=5 // pred_check_branch
        %251 = sbr.rel (%p249) target = $region40
      $region39: #{tpu_custom_call.1} parent=5 // pred_region
        // Predicated region
        $region41: #{tpu_custom_call.1} parent=39 // pred_check
          %p252 = pneg %p48
        $region42: #{tpu_custom_call.1} parent=39 // pred_check_branch
          %254 = sbr.rel (%p252) target = $region44
        $region43: #{tpu_custom_call.1} parent=39 // pred_region
          %s255 = smul.u32 2, %s22
          %p256 = scmp.lt.s32.totalorder %s21, 0
          %s257 = scalar_select %p256, %s21, 0
          %p258 = scmp.lt.s32.totalorder %s255, 3
          %s259 = scalar_select %p258, %s255, 3
          %s260 = smul.addr %s257, 4
          %s261 = sadd.s32 %s259, %s260
          %s262 = smul.addr %s261, 4
          %s263 = scalar_lea.vmem %s0, %s262
          %s264 = smul.u32 2, %s22
        $region44: #{tpu_custom_call.1} parent=39 // pred_fallthru
          _
      $region40: #{tpu_custom_call.1} parent=5 // pred_fallthru
        _
      %p265 = scmp.le.s32.totalorder 1, %s14
      %p266 = scmp.lt.s32.totalorder %s14, 3
      %p267 = pnand %p265, %p266
      %p268 = pneg %p267
      // Predicated region
      $region45: #{tpu_custom_call.1} parent=5 // pred_check
        _
      $region46: #{tpu_custom_call.1} parent=5 // pred_check_branch
        %270 = sbr.rel (%p267) target = $region48
      $region47: #{tpu_custom_call.1} parent=5 // pred_region
        %s271 = ssub.s32 %s14, 1
        %s272 = smul.u32 2, %s24
        %p273 = scmp.lt.s32.totalorder %s23, 0
        %s274 = scalar_select %p273, %s23, 0
        %p275 = scmp.lt.s32.totalorder %s272, 3
        %s276 = scalar_select %p275, %s272, 3
        %s277 = smul.addr %s274, 4
        %s278 = sadd.s32 %s276, %s277
        %s279 = smul.addr %s278, 4
        %s280 = scalar_lea.vmem %s0, %s279
        %p281 = pneg %p54
        %p282 = pneg %p51
        %p283 = scmp.lt.s32.totalorder %s23, 0
        %s284 = scalar_select %p283, %s23, 0
        %s285 = smul.addr %s284, 4
        %s286 = scalar_lea.vmem %s1, %s285
        %p287 = pneg %p80
        %p288 = pneg %p77
        %p289 = pneg %p101
        %p290 = pneg %p98
        %p291 = pneg %p122
        %p292 = pneg %p119
        %p293 = pneg %p143
        %p294 = pneg %p140
        %p295 = pneg %p164
        %p296 = pneg %p161
        %p297 = pneg %p185
        %p298 = pneg %p182
        %p299 = pneg %p211
        %p300 = pneg %p208
        %s301 = smul.u32 2, %s24
        %p302 = scmp.lt.s32.totalorder %s23, 0
        %s303 = scalar_select %p302, %s23, 0
        %p304 = scmp.lt.s32.totalorder %s301, 3
        %s305 = scalar_select %p304, %s301, 3
        %s306 = smul.addr %s303, 4
        %s307 = sadd.s32 %s305, %s306
        %s308 = smul.addr %s307, 4
        %s309 = scalar_lea.vmem %s0, %s308
        %s310 = smul.u32 2, %s24
        %p311 = scmp.lt.s32.totalorder %s23, 0
        %s312 = scalar_select %p311, %s23, 0
        %s313 = smul.addr %s312, 4
        %s314 = scalar_lea.vmem %s1, %s313
        %p316 = scmp.eq.s32.totalorder %s24, 0
        // Predicated region
        $region49: #{tpu_custom_call.1} parent=47 // pred_check
          %p317 = pneg %p316
        $region50: #{tpu_custom_call.1} parent=47 // pred_check_branch
          %319 = sbr.rel (%p317) target = $region52
        $region51: #{tpu_custom_call.1} parent=47 // pred_region
          %vm320 = vcmask 257024
          %321 = vst.msk [vmem:[#allocation2] sm:$0xf] %vm320, 0.0
        $region52: #{tpu_custom_call.1} parent=47 // pred_fallthru
          _
        %v322 = vld [vmem:[%s309] sm:$0xf]
        %v323 = vld [vmem:[%s309 + $0x4] sm:$0xf]
        %v324 = vld [vmem:[%s2] sm:$0xf]
        %v327 = vunpack.c.l.b16 %v322
        %v328 = vunpack.c.l.b16 %v323
        %v329 = vpack.c.b16 %v328, %v327
        %vm330 = vcmask 64512
        %v332 = vsel %vm330, %v329, 0
        %vm334 = vcmask 1043456
        %v336 = vsel %vm334, %v324, 0
        %338 = vmatprep.subr.bf16.mxu0 0
        %339 = vmatpush1.bf16.msra.mxu0 %v336
        %340 = vmatprep.subr.bf16.mxu0 0
        %341 = vmatpush1.bf16.msra.mxu0 0
        %342 = vmatprep.subr.bf16.mxu0 0
        %343 = vmatpush1.bf16.msra.mxu0 0
        %344 = vmatprep.subr.bf16.mxu0 0
        %345 = vmatpush1.bf16.msra.mxu0 0
        %346 = vmatprep.subr.bf16.mxu0 0
        %347 = vmatpush1.bf16.msra.mxu0 0
        %348 = vmatprep.subr.bf16.mxu0 0
        %349 = vmatpush1.bf16.msra.mxu0 0
        %350 = vmatprep.subr.bf16.mxu0 0
        %351 = vmatpush1.bf16.msra.mxu0 0
        %352 = vmatprep.subr.bf16.mxu0 0
        %353 = vmatpush1.bf16.msra.mxu0 0
        %354 = vmatprep.subr.bf16.mxu0 0
        %355 = vmatpush1.bf16.msra.mxu0 0
        %356 = vmatprep.subr.bf16.mxu0 0
        %357 = vmatpush1.bf16.msra.mxu0 0
        %358 = vmatprep.subr.bf16.mxu0 0
        %359 = vmatpush1.bf16.msra.mxu0 0
        %360 = vmatprep.subr.bf16.mxu0 0
        %361 = vmatpush1.bf16.msra.mxu0 0
        %362 = vmatprep.subr.bf16.mxu0 0
        %363 = vmatpush1.bf16.msra.mxu0 0
        %364 = vmatprep.subr.bf16.mxu0 0
        %365 = vmatpush1.bf16.msra.mxu0 0
        %366 = vmatprep.subr.bf16.mxu0 0
        %367 = vmatpush1.bf16.msra.mxu0 0
        %368 = vmatprep.subr.bf16.mxu0 0
        %369 = vmatpush1.bf16.msra.mxu0 0
        %370 = vmatprep.mubr.bf16.mxu0 0
        %371 = vmatmul.mubr.bf16.gmra.mrb[0].mxu0 %v332
        %v372 = vpop.f32.mrb[0].mxu0
        %v373 = vadd.f32 0.0, %v372
        %v374 = vpop.f32.mrb[0].mxu0
        %v375 = vpop.f32.mrb[0].mxu0
        %v376 = vadd.f32 0.0, %v375
        %v377 = vpop.f32.mrb[0].mxu0
        %378 = vdwg.mxu0
        %vm379 = vcmask 785408
        %380 = vst.msk [vmem:[#allocation3] sm:$0xff] %vm379, %v373
        %381 = vst.msk [vmem:[#allocation3 + $0x8] sm:$0xff] %vm379, %v376
        %v382 = vld [vmem:[%s3] sm:$0xf]
        %v383 = vld [vmem:[%s3 + $0x4] sm:$0xf]
        %v384 = vld [vmem:[%s3 + $0x8] sm:$0xf]
        %v385 = vld [vmem:[%s3 + $0xc] sm:$0xf]
        %v386 = vld [vmem:[%s4] sm:$0x1]
        %v387 = vld [vmem:[%s314] sm:$0xf]
        %s388 = smul.u32 %s24, 4
        %v389 = vld [vmem:[#allocation2] sm:$0xf]
        %v390 = vld [vmem:[#allocation3] sm:$0xf]
        %v391 = vpack.c.bf16 %v389, %v389
        %v396 = vunpack.c.l.b16 %v382
        %v397 = vunpack.c.l.b16 %v383
        %v398 = vunpack.c.l.b16 %v384
        %v399 = vunpack.c.l.b16 %v385
        %v400 = vpack.c.b16 %v397, %v396
        %v401 = vpack.c.b16 %v399, %v398
        %vm404 = vcmask 261120
        %v406 = vsel %vm404, %v391, 0
        %408 = vmatprep.subr.bf16.mxu0 0
        %409 = vmatpush1.bf16.msra.mxu0 %v400
        %410 = vmatprep.subr.bf16.mxu0 0
        %411 = vmatpush1.bf16.msra.mxu0 %v401
        %412 = vmatprep.subr.bf16.mxu0 0
        %413 = vmatpush1.bf16.msra.mxu0 0
        %414 = vmatprep.subr.bf16.mxu0 0
        %415 = vmatpush1.bf16.msra.mxu0 0
        %416 = vmatprep.subr.bf16.mxu0 0
        %417 = vmatpush1.bf16.msra.mxu0 0
        %418 = vmatprep.subr.bf16.mxu0 0
        %419 = vmatpush1.bf16.msra.mxu0 0
        %420 = vmatprep.subr.bf16.mxu0 0
        %421 = vmatpush1.bf16.msra.mxu0 0
        %422 = vmatprep.subr.bf16.mxu0 0
        %423 = vmatpush1.bf16.msra.mxu0 0
        %424 = vmatprep.subr.bf16.mxu0 0
        %425 = vmatpush1.bf16.msra.mxu0 0
        %426 = vmatprep.subr.bf16.mxu0 0
        %427 = vmatpush1.bf16.msra.mxu0 0
        %428 = vmatprep.subr.bf16.mxu0 0
        %429 = vmatpush1.bf16.msra.mxu0 0
        %430 = vmatprep.subr.bf16.mxu0 0
        %431 = vmatpush1.bf16.msra.mxu0 0
        %432 = vmatprep.subr.bf16.mxu0 0
        %433 = vmatpush1.bf16.msra.mxu0 0
        %434 = vmatprep.subr.bf16.mxu0 0
        %435 = vmatpush1.bf16.msra.mxu0 0
        %436 = vmatprep.subr.bf16.mxu0 0
        %437 = vmatpush1.bf16.msra.mxu0 0
        %438 = vmatprep.subr.bf16.mxu0 0
        %439 = vmatpush1.bf16.msra.mxu0 0
        %440 = vmatprep.mubr.bf16.mxu0 0
        %441 = vmatmul.mubr.bf16.gmra.mrb[0].mxu0 %v406
        %v442 = vpop.f32.mrb[0].mxu0
        %v443 = vadd.f32 0.0, %v442
        %v444 = vpop.f32.mrb[0].mxu0
        %v445 = vpop.f32.mrb[0].mxu0
        %v446 = vpop.f32.mrb[0].mxu0
        %447 = vdwg.mxu0
        %v448 = vadd.f32 %v390, %v443
        %v450 = vlaneseq
        %v451 = vshrl.u32 %v450, 7
        %v452 = vsub.s32 0, %v451
        %v453 = vrot.slane %v386, %v452
        %v455 = vadd.f32 %v448, %v453
        %v456 = vxor.u32 %v455, 2147483648
        %v457 = vmul.f32 %v456, 1.442695
        %v458 = vpow.pop %v457
        %v459 = vadd.f32 %v458, 1.0
        %v460 = vrcp.pop %v459
        %v461 = vmul.f32 1.0, %v460
        %v462 = vadd.f32 %v390, %v453
        %463 = vrot.lane.b32.xlu0 %v453, 96
        %v464 = vpop.permute.xlu0 %463
        %v466 = vadd.f32 %v443, %v464
        %468 = vrot.lane.b32.xlu0 %v466, 64
        %v469 = vpop.permute.xlu0 %468
        %v471 = vmul.f32 %v461, %v469
        %473 = vrot.lane.b32.xlu0 %v471, 64
        %v474 = vpop.permute.xlu0 %473
        %v476 = vadd.f32 %v462, %v474
        %v477 = vtanh.pop %v476
        %v478 = vsub.f32 1.0, %v461
        %480 = vrot.lane.b32.xlu0 %v477, 96
        %v481 = vpop.permute.xlu0 %480
        %v483 = vmul.f32 %v478, %v481
        %485 = vrot.lane.b32.xlu0 %v389, 32
        %v486 = vpop.permute.xlu0 %485
        %v488 = vmul.f32 %v461, %v486
        %v489 = vadd.f32 %v483, %v488
        %v490 = vstv %s388
        %vm491 = vcmp.lt.s32.totalorder %v490, %v387
        %v492 = vsel %vm491, 1, 0
        %493 = vset.pattern.permute.xlu0 0
        %494 = vperm.xlu0 %493, %v492
        %v495 = vpop.permute.xlu0 %494
        %vm496 = vcmp.eq.s32.totalorder %v495, 1
        %v497 = vsel %vm496, %v489, %v486
        %s498 = scalar_lea.vmem [#allocation3], 4
        %v499 = vld [vmem:[%s498] sm:$0xf]
        %v500 = vpack.c.bf16 %v497, %v497
        %502 = vrot.lane.b32.xlu0 %v500, 96
        %v503 = vpop.permute.xlu0 %502
        %v505 = vsel %vm404, %v503, 0
        %507 = vmatprep.subr.bf16.mxu0 0
        %508 = vmatpush1.bf16.msra.mxu0 %v400
        %509 = vmatprep.subr.bf16.mxu0 0
        %510 = vmatpush1.bf16.msra.mxu0 %v401
        %511 = vmatprep.subr.bf16.mxu0 0
        %512 = vmatpush1.bf16.msra.mxu0 0
        %513 = vmatprep.subr.bf16.mxu0 0
        %514 = vmatpush1.bf16.msra.mxu0 0
        %515 = vmatprep.subr.bf16.mxu0 0
        %516 = vmatpush1.bf16.msra.mxu0 0
        %517 = vmatprep.subr.bf16.mxu0 0
        %518 = vmatpush1.bf16.msra.mxu0 0
        %519 = vmatprep.subr.bf16.mxu0 0
        %520 = vmatpush1.bf16.msra.mxu0 0
        %521 = vmatprep.subr.bf16.mxu0 0
        %522 = vmatpush1.bf16.msra.mxu0 0
        %523 = vmatprep.subr.bf16.mxu0 0
        %524 = vmatpush1.bf16.msra.mxu0 0
        %525 = vmatprep.subr.bf16.mxu0 0
        %526 = vmatpush1.bf16.msra.mxu0 0
        %527 = vmatprep.subr.bf16.mxu0 0
        %528 = vmatpush1.bf16.msra.mxu0 0
        %529 = vmatprep.subr.bf16.mxu0 0
        %530 = vmatpush1.bf16.msra.mxu0 0
        %531 = vmatprep.subr.bf16.mxu0 0
        %532 = vmatpush1.bf16.msra.mxu0 0
        %533 = vmatprep.subr.bf16.mxu0 0
        %534 = vmatpush1.bf16.msra.mxu0 0
        %535 = vmatprep.subr.bf16.mxu0 0
        %536 = vmatpush1.bf16.msra.mxu0 0
        %537 = vmatprep.subr.bf16.mxu0 0
        %538 = vmatpush1.bf16.msra.mxu0 0
        %539 = vmatprep.mubr.bf16.mxu0 0
        %540 = vmatmul.mubr.bf16.gmra.mrb[0].mxu0 %v505
        %v541 = vpop.f32.mrb[0].mxu0
        %v542 = vadd.f32 0.0, %v541
        %v543 = vpop.f32.mrb[0].mxu0
        %v544 = vpop.f32.mrb[0].mxu0
        %v545 = vpop.f32.mrb[0].mxu0
        %546 = vdwg.mxu0
        %v547 = vadd.f32 %v499, %v542
        %v548 = vadd.f32 %v547, %v453
        %v549 = vxor.u32 %v548, 2147483648
        %v550 = vmul.f32 %v549, 1.442695
        %v551 = vpow.pop %v550
        %v552 = vadd.f32 %v551, 1.0
        %v553 = vrcp.pop %v552
        %v554 = vmul.f32 1.0, %v553
        %v555 = vadd.f32 %v499, %v453
        %v556 = vadd.f32 %v542, %v464
        %558 = vrot.lane.b32.xlu0 %v556, 64
        %v559 = vpop.permute.xlu0 %558
        %v561 = vmul.f32 %v554, %v559
        %563 = vrot.lane.b32.xlu0 %v561, 64
        %v564 = vpop.permute.xlu0 %563
        %v566 = vadd.f32 %v555, %v564
        %v567 = vtanh.pop %v566
        %v568 = vsub.f32 1.0, %v554
        %570 = vrot.lane.b32.xlu0 %v567, 96
        %v571 = vpop.permute.xlu0 %570
        %v573 = vmul.f32 %v568, %v571
        %v574 = vmul.f32 %v554, %v497
        %v575 = vadd.f32 %v573, %v574
        %s576 = sadd.s32 %s388, 1
        %v577 = vstv %s576
        %vm578 = vcmp.lt.s32.totalorder %v577, %v387
        %v579 = vsel %vm578, 1, 0
        %580 = vset.pattern.permute.xlu0 0
        %581 = vperm.xlu0 %580, %v579
        %v582 = vpop.permute.xlu0 %581
        %vm583 = vcmp.eq.s32.totalorder %v582, 1
        %v584 = vsel %vm583, %v575, %v497
        %s585 = scalar_lea.vmem [#allocation3], 8
        %v586 = vld [vmem:[%s585] sm:$0xf]
        %v587 = vpack.c.bf16 %v584, %v584
        %589 = vrot.lane.b32.xlu0 %v587, 96
        %v590 = vpop.permute.xlu0 %589
        %v592 = vsel %vm404, %v590, 0
        %594 = vmatprep.subr.bf16.mxu0 0
        %595 = vmatpush1.bf16.msra.mxu0 %v400
        %596 = vmatprep.subr.bf16.mxu0 0
        %597 = vmatpush1.bf16.msra.mxu0 %v401
        %598 = vmatprep.subr.bf16.mxu0 0
        %599 = vmatpush1.bf16.msra.mxu0 0
        %600 = vmatprep.subr.bf16.mxu0 0
        %601 = vmatpush1.bf16.msra.mxu0 0
        %602 = vmatprep.subr.bf16.mxu0 0
        %603 = vmatpush1.bf16.msra.mxu0 0
        %604 = vmatprep.subr.bf16.mxu0 0
        %605 = vmatpush1.bf16.msra.mxu0 0
        %606 = vmatprep.subr.bf16.mxu0 0
        %607 = vmatpush1.bf16.msra.mxu0 0
        %608 = vmatprep.subr.bf16.mxu0 0
        %609 = vmatpush1.bf16.msra.mxu0 0
        %610 = vmatprep.subr.bf16.mxu0 0
        %611 = vmatpush1.bf16.msra.mxu0 0
        %612 = vmatprep.subr.bf16.mxu0 0
        %613 = vmatpush1.bf16.msra.mxu0 0
        %614 = vmatprep.subr.bf16.mxu0 0
        %615 = vmatpush1.bf16.msra.mxu0 0
        %616 = vmatprep.subr.bf16.mxu0 0
        %617 = vmatpush1.bf16.msra.mxu0 0
        %618 = vmatprep.subr.bf16.mxu0 0
        %619 = vmatpush1.bf16.msra.mxu0 0
        %620 = vmatprep.subr.bf16.mxu0 0
        %621 = vmatpush1.bf16.msra.mxu0 0
        %622 = vmatprep.subr.bf16.mxu0 0
        %623 = vmatpush1.bf16.msra.mxu0 0
        %624 = vmatprep.subr.bf16.mxu0 0
        %625 = vmatpush1.bf16.msra.mxu0 0
        %626 = vmatprep.mubr.bf16.mxu0 0
        %627 = vmatmul.mubr.bf16.gmra.mrb[0].mxu0 %v592
        %v628 = vpop.f32.mrb[0].mxu0
        %v629 = vadd.f32 0.0, %v628
        %v630 = vpop.f32.mrb[0].mxu0
        %v631 = vpop.f32.mrb[0].mxu0
        %v632 = vpop.f32.mrb[0].mxu0
        %633 = vdwg.mxu0
        %v634 = vadd.f32 %v586, %v629
        %v635 = vadd.f32 %v634, %v453
        %v636 = vxor.u32 %v635, 2147483648
        %v637 = vmul.f32 %v636, 1.442695
        %v638 = vpow.pop %v637
        %v639 = vadd.f32 %v638, 1.0
        %v640 = vrcp.pop %v639
        %v641 = vmul.f32 1.0, %v640
        %v642 = vadd.f32 %v586, %v453
        %v643 = vadd.f32 %v629, %v464
        %645 = vrot.lane.b32.xlu0 %v643, 64
        %v646 = vpop.permute.xlu0 %645
        %v648 = vmul.f32 %v641, %v646
        %650 = vrot.lane.b32.xlu0 %v648, 64
        %v651 = vpop.permute.xlu0 %650
        %v653 = vadd.f32 %v642, %v651
        %v654 = vtanh.pop %v653
        %v655 = vsub.f32 1.0, %v641
        %657 = vrot.lane.b32.xlu0 %v654, 96
        %v658 = vpop.permute.xlu0 %657
        %v660 = vmul.f32 %v655, %v658
        %v661 = vmul.f32 %v641, %v584
        %v662 = vadd.f32 %v660, %v661
        %s663 = sadd.s32 %s388, 2
        %v664 = vstv %s663
        %vm665 = vcmp.lt.s32.totalorder %v664, %v387
        %v666 = vsel %vm665, 1, 0
        %667 = vset.pattern.permute.xlu0 0
        %668 = vperm.xlu0 %667, %v666
        %v669 = vpop.permute.xlu0 %668
        %vm670 = vcmp.eq.s32.totalorder %v669, 1
        %v671 = vsel %vm670, %v662, %v584
        %s672 = scalar_lea.vmem [#allocation3], 12
        %v673 = vld [vmem:[%s672] sm:$0xf]
        %v674 = vpack.c.bf16 %v671, %v671
        %676 = vrot.lane.b32.xlu0 %v674, 96
        %v677 = vpop.permute.xlu0 %676
        %v679 = vsel %vm404, %v677, 0
        %681 = vmatprep.subr.bf16.mxu0 0
        %682 = vmatpush1.bf16.msra.mxu0 %v400
        %683 = vmatprep.subr.bf16.mxu0 0
        %684 = vmatpush1.bf16.msra.mxu0 %v401
        %685 = vmatprep.subr.bf16.mxu0 0
        %686 = vmatpush1.bf16.msra.mxu0 0
        %687 = vmatprep.subr.bf16.mxu0 0
        %688 = vmatpush1.bf16.msra.mxu0 0
        %689 = vmatprep.subr.bf16.mxu0 0
        %690 = vmatpush1.bf16.msra.mxu0 0
        %691 = vmatprep.subr.bf16.mxu0 0
        %692 = vmatpush1.bf16.msra.mxu0 0
        %693 = vmatprep.subr.bf16.mxu0 0
        %694 = vmatpush1.bf16.msra.mxu0 0
        %695 = vmatprep.subr.bf16.mxu0 0
        %696 = vmatpush1.bf16.msra.mxu0 0
        %697 = vmatprep.subr.bf16.mxu0 0
        %698 = vmatpush1.bf16.msra.mxu0 0
        %699 = vmatprep.subr.bf16.mxu0 0
        %700 = vmatpush1.bf16.msra.mxu0 0
        %701 = vmatprep.subr.bf16.mxu0 0
        %702 = vmatpush1.bf16.msra.mxu0 0
        %703 = vmatprep.subr.bf16.mxu0 0
        %704 = vmatpush1.bf16.msra.mxu0 0
        %705 = vmatprep.subr.bf16.mxu0 0
        %706 = vmatpush1.bf16.msra.mxu0 0
        %707 = vmatprep.subr.bf16.mxu0 0
        %708 = vmatpush1.bf16.msra.mxu0 0
        %709 = vmatprep.subr.bf16.mxu0 0
        %710 = vmatpush1.bf16.msra.mxu0 0
        %711 = vmatprep.subr.bf16.mxu0 0
        %712 = vmatpush1.bf16.msra.mxu0 0
        %713 = vmatprep.mubr.bf16.mxu0 0
        %714 = vmatmul.mubr.bf16.gmra.mrb[0].mxu0 %v679
        %v715 = vpop.f32.mrb[0].mxu0
        %v716 = vadd.f32 0.0, %v715
        %v717 = vpop.f32.mrb[0].mxu0
        %v718 = vpop.f32.mrb[0].mxu0
        %v719 = vpop.f32.mrb[0].mxu0
        %720 = vdwg.mxu0
        %v721 = vadd.f32 %v673, %v716
        %v722 = vadd.f32 %v721, %v453
        %v723 = vxor.u32 %v722, 2147483648
        %v724 = vmul.f32 %v723, 1.442695
        %v725 = vpow.pop %v724
        %v726 = vadd.f32 %v725, 1.0
        %v727 = vrcp.pop %v726
        %v728 = vmul.f32 1.0, %v727
        %v729 = vadd.f32 %v673, %v453
        %v730 = vadd.f32 %v716, %v464
        %732 = vrot.lane.b32.xlu0 %v730, 64
        %v733 = vpop.permute.xlu0 %732
        %v735 = vmul.f32 %v728, %v733
        %737 = vrot.lane.b32.xlu0 %v735, 64
        %v738 = vpop.permute.xlu0 %737
        %v740 = vadd.f32 %v729, %v738
        %v741 = vtanh.pop %v740
        %v742 = vsub.f32 1.0, %v728
        %744 = vrot.lane.b32.xlu0 %v741, 96
        %v745 = vpop.permute.xlu0 %744
        %v747 = vmul.f32 %v742, %v745
        %v748 = vmul.f32 %v728, %v671
        %v749 = vadd.f32 %v747, %v748
        %s750 = sadd.s32 %s388, 3
        %v751 = vstv %s750
        %vm752 = vcmp.lt.s32.totalorder %v751, %v387
        %v753 = vsel %vm752, 1, 0
        %754 = vset.pattern.permute.xlu0 0
        %755 = vperm.xlu0 %754, %v753
        %v756 = vpop.permute.xlu0 %755
        %vm757 = vcmp.eq.s32.totalorder %v756, 1
        %v758 = vsel %vm757, %v749, %v671
        %760 = vrot.lane.b32.xlu0 %v758, 96
        %v761 = vpop.permute.xlu0 %760
        %vm763 = vcmask 257024
        %764 = vst.msk [vmem:[#allocation2] sm:$0xf] %vm763, %v761
        %p765 = scmp.eq.s32.totalorder %s24, 1
        // Predicated region
        $region53: #{tpu_custom_call.1} parent=47 // pred_check
          %p766 = pneg %p765
        $region54: #{tpu_custom_call.1} parent=47 // pred_check_branch
          %768 = sbr.rel (%p766) target = $region56
        $region55: #{tpu_custom_call.1} parent=47 // pred_region
          %v769 = vld [vmem:[%s5] sm:$0xff]
          %v770 = vld [vmem:[%s5 + $0x8] sm:$0xff]
          %v771 = vld [vmem:[%s5 + $0x10] sm:$0xff]
          %v772 = vld [vmem:[%s5 + $0x18] sm:$0xff]
          %v773 = vld [vmem:[%s6] sm:$0x1]
          %v775 = vlaneseq
          %v776 = vshrl.u32 %v775, 7
          %v777 = vsub.s32 0, %v776
          %v778 = vrot.slane %v773, %v777
          %v780 = vsel %vm404, %v761, 0
          %782 = vmatprep.subr.mxu0 0.0
          %783 = vmatpush1.msra.mxu0 %v769
          %784 = vmatprep.subr.mxu0 0.0
          %785 = vmatpush1.msra.mxu0 %v770
          %786 = vmatprep.subr.mxu0 0.0
          %787 = vmatpush1.msra.mxu0 %v771
          %788 = vmatprep.subr.mxu0 0.0
          %789 = vmatpush1.msra.mxu0 %v772
          %790 = vmatprep.subr.mxu0 0.0
          %791 = vmatpush1.msra.mxu0 0.0
          %792 = vmatprep.subr.mxu0 0.0
          %793 = vmatpush1.msra.mxu0 0.0
          %794 = vmatprep.subr.mxu0 0.0
          %795 = vmatpush1.msra.mxu0 0.0
          %796 = vmatprep.subr.mxu0 0.0
          %797 = vmatpush1.msra.mxu0 0.0
          %798 = vmatprep.subr.mxu0 0.0
          %799 = vmatpush1.msra.mxu0 0.0
          %800 = vmatprep.subr.mxu0 0.0
          %801 = vmatpush1.msra.mxu0 0.0
          %802 = vmatprep.subr.mxu0 0.0
          %803 = vmatpush1.msra.mxu0 0.0
          %804 = vmatprep.subr.mxu0 0.0
          %805 = vmatpush1.msra.mxu0 0.0
          %806 = vmatprep.subr.mxu0 0.0
          %807 = vmatpush1.msra.mxu0 0.0
          %808 = vmatprep.subr.mxu0 0.0
          %809 = vmatpush1.msra.mxu0 0.0
          %810 = vmatprep.subr.mxu0 0.0
          %811 = vmatpush1.msra.mxu0 0.0
          %812 = vmatprep.subr.mxu0 0.0
          %813 = vmatpush1.msra.mxu0 0.0
          %814 = vmatprep.subr.mxu0 0.0
          %815 = vmatpush1.msra.mxu0 0.0
          %816 = vmatprep.subr.mxu0 0.0
          %817 = vmatpush1.msra.mxu0 0.0
          %818 = vmatprep.subr.mxu0 0.0
          %819 = vmatpush1.msra.mxu0 0.0
          %820 = vmatprep.subr.mxu0 0.0
          %821 = vmatpush1.msra.mxu0 0.0
          %822 = vmatprep.subr.mxu0 0.0
          %823 = vmatpush1.msra.mxu0 0.0
          %824 = vmatprep.subr.mxu0 0.0
          %825 = vmatpush1.msra.mxu0 0.0
          %826 = vmatprep.subr.mxu0 0.0
          %827 = vmatpush1.msra.mxu0 0.0
          %828 = vmatprep.subr.mxu0 0.0
          %829 = vmatpush1.msra.mxu0 0.0
          %830 = vmatprep.subr.mxu0 0.0
          %831 = vmatpush1.msra.mxu0 0.0
          %832 = vmatprep.subr.mxu0 0.0
          %833 = vmatpush1.msra.mxu0 0.0
          %834 = vmatprep.subr.mxu0 0.0
          %835 = vmatpush1.msra.mxu0 0.0
          %836 = vmatprep.subr.mxu0 0.0
          %837 = vmatpush1.msra.mxu0 0.0
          %838 = vmatprep.subr.mxu0 0.0
          %839 = vmatpush1.msra.mxu0 0.0
          %840 = vmatprep.subr.mxu0 0.0
          %841 = vmatpush1.msra.mxu0 0.0
          %842 = vmatprep.subr.mxu0 0.0
          %843 = vmatpush1.msra.mxu0 0.0
          %844 = vmatprep.subr.mxu0 0.0
          %845 = vmatpush1.msra.mxu0 0.0
          %846 = vmatprep.mubr.f32.mxu0 0.0
          %847 = vmatmul.mubr.f32.gmra.mrb[0].mxu0 %v780
          %v848 = vpop.f32.mrb[0].mxu0
          %v849 = vadd.f32 %v778, %v848
          %v850 = vpop.f32.mrb[0].mxu0
          %851 = vdwg.mxu0
          %vm852 = vcmask 44032
          %853 = vst.msk [vmem:[#allocation4] sm:$0xf] %vm852, %v849
        $region56: #{tpu_custom_call.1} parent=47 // pred_fallthru
          _
        // Predicated region
        $region57: #{tpu_custom_call.1} parent=47 // pred_check
          %p854 = pneg %p208
        $region58: #{tpu_custom_call.1} parent=47 // pred_check_branch
          %856 = sbr.rel (%p854) target = $region60
        $region59: #{tpu_custom_call.1} parent=47 // pred_region
          %s858 = ssub.s32 64, 64
          %859 = vsyncadd [#allocation5], %s858
          %s860 = smul.addr %s23, 64
          %s861 = scalar_lea.hbm %s7, %s860
          %s863 = sshll.u32 [#allocation4], 4
          %s864 = int_to_ptr.vmem [resolvable:$true] %s863
          %866 = dma.vmem_to_hbm [thread:$0]  %s864, 64, %s861, [#allocation5]
        $region60: #{tpu_custom_call.1} parent=47 // pred_fallthru
          _
        // Predicated region
        $region61: #{tpu_custom_call.1} parent=47 // pred_check
          %p867 = pneg %p208
        $region62: #{tpu_custom_call.1} parent=47 // pred_check_branch
          %869 = sbr.rel (%p867) target = $region64
        $region63: #{tpu_custom_call.1} parent=47 // pred_region
          %870 = dma.done [#allocation5], 64
        $region64: #{tpu_custom_call.1} parent=47 // pred_fallthru
          _
      $region48: #{tpu_custom_call.1} parent=5 // pred_fallthru
        _
      %p871 = scmp.le.s32.totalorder 2, %s14
      // Predicated region
      $region65: #{tpu_custom_call.1} parent=5 // pred_check
        %p872 = pneg %p871
      $region66: #{tpu_custom_call.1} parent=5 // pred_check_branch
        %874 = sbr.rel (%p872) target = $region68
      $region67: #{tpu_custom_call.1} parent=5 // pred_region
        %s875 = ssub.s32 %s14, 2
      $region68: #{tpu_custom_call.1} parent=5 // pred_fallthru
        _
    $region6: #{tpu_custom_call.1} parent=1 // loop_footer
      %s18 = sadd.s32 1, %s14
    $region7: #{tpu_custom_call.1} parent=1 // loop_footer_branch
      %13 = sbr.rel target = $region3
    $region8: #{tpu_custom_call.1} parent=1 // loop_exit
      _
    %876 = vsyncpa [#allocation5], 1
    %s877 = scalar_lea.sflag [#allocation5], 1
    %878 = vsyncpa %s877, 1

</llo_original>
